<compile_context>
chip_gen: v6e
topology: v6e:2x2x1
jax: 0.10.0
libtpu: 0.0.40
codegen_flags: <defaults>
</compile_context>

<pallas_src>
import functools

import jax
import jax.numpy as jnp
from jax.experimental import pallas as pl
from jax.experimental.pallas import tpu as pltpu

GAMMA = 2.0            # module default; statically 2 -> squared focal weight
ALPHA = 0.25
EPS = 1e-6             # reference only; redundant given the +/-10 logit clamp
LANES = 128
ROW_ALIGN = 8          # slab rows multiple of 8 -> clean f32/bf16/int8 packing
BLOCK_ALIGN = 32       # block rows multiple of 32 -> valid tile for int8 too


def _cdiv(a, b):
    return -(-a // b)


def _round_up(a, b):
    return _cdiv(a, b) * b


def _focal_loss_kernel(logits_ref, labels_ref, lw_ref, out_ref):
    x = jnp.clip(logits_ref[...].astype(jnp.float32), -10.0, 10.0)
    y = labels_ref[...].astype(jnp.float32)
    pw = lw_ref[...].astype(jnp.float32)

    # Single softplus; everything else derived from it (EUP relief).
    sp = jax.nn.softplus(-x)          # = -log(sigmoid(x)) >= 0
    p = jnp.exp(-sp)                  # sigmoid(x); |x|<=10 -> p in [4.5e-5, 1-4.5e-5],
                                      # so the reference's clip(p, eps, 1-eps) is a no-op.
    # log(sigmoid(x)) = -sp ;  log(1 - sigmoid(x)) = -(x + sp)

    # Hard {0,1} labels assumed (module default label_smoothing=None):
    #   1 - pt          == 1-p if y==1 else p
    #   alpha_t * y     == ALPHA * y
    #   alpha_t * (1-y) == (1-ALPHA) * (1-y)
    pos = y != 0.0
    w = jnp.where(pos, 1.0 - p, p)            # = 1 - pt (clip(pt, eps, 1) is a no-op)
    a = (ALPHA * pw) * y                      # alpha_t * pos_weight * y
    b = (1.0 - ALPHA) * (1.0 - y)             # alpha_t * (1 - y)
    # alpha_t * (1-pt)^2 * BCEWithLogits(pos_weight) , gamma == 2 -> square.
    loss = (w * w) * (a * sp + b * (x + sp))
    out_ref[...] = loss.astype(out_ref.dtype)


def _chip_block_rows():
    """(rows per block, is_two_core_chip) chosen per TPU generation."""
    try:
        info = pltpu.get_tpu_info()
        # v7x: 64 MiB VMEM/TC, ~3.2 TB/s HBM/TC, 2 TCs -> bigger blocks amortize
        # the fixed per-grid-step overhead (4096x128 f32 = 2 MiB per pipeline
        # buffer, well under the 32 MiB scoped-VMEM default).
        if info.vmem_capacity_bytes <= 64 * 1024 * 1024:
            return 4096, True
    except Exception:  # interpret mode / unknown chip -> conservative default
        pass
    # v5e/v6e (128 MiB VMEM, 1 TC): 1024 rows already sits at ~85% of their HBM
    # roofline and stays inside v5e's 16 MiB scoped-VMEM default.
    return 1024, False


@functools.partial(jax.jit, static_argnames=("out_dtype",))
def focal_loss(logits, labels, label_weights, out_dtype=jnp.float32):
    """Per-element focal loss (reduction='none'). Returns (loss, gamma).

    out_dtype=jnp.bfloat16 may be passed to cut output HBM traffic if the
    consumer tolerates it; default float32 matches the PyTorch module.
    """
    assert logits.shape == labels.shape == label_weights.shape
    orig_shape = logits.shape
    n = logits.size

    rows = _round_up(_cdiv(n, LANES), ROW_ALIGN)
    slab_n = rows * LANES

    def as_slab(a):
        a = a.reshape(-1)
        if slab_n != n:
            # Minimal tail pad (< 1024 elements of target size). This is the only
            # wrapper-side copy and it vanishes when the producer supplies
            # N % 1024 == 0.
            # TODO(synk): accept a pre-padded (rows, 128) slab from the producer
            # to make ragged N zero-copy as well.
            a = jnp.pad(a, (0, slab_n - n))
        return a.reshape(rows, LANES)          # contiguous reshape: free

    l2 = as_slab(logits)
    y2 = as_slab(labels)
    w2 = as_slab(label_weights)

    chip_block, two_core = _chip_block_rows()
    if rows <= chip_block:
        if two_core and rows >= 2 * BLOCK_ALIGN:
            # Split even a single-block problem in two so both v7x cores work.
            block_rows = _round_up(_cdiv(rows, 2), BLOCK_ALIGN)
        else:
            block_rows = rows                  # full-extent block: always legal
    else:
        block_rows = chip_block
    num_blocks = _cdiv(rows, block_rows)
    if two_core and num_blocks > 2 and num_blocks % 2 == 1:
        # Re-split into an even number of smaller equal blocks instead of adding
        # a phantom block: balances the two TensorCores with zero extra DMA.
        block_rows = _round_up(_cdiv(rows, num_blocks + 1), BLOCK_ALIGN)
        num_blocks = _cdiv(rows, block_rows)

    spec = pl.BlockSpec((block_rows, LANES), lambda i: (i, 0))
    out_itemsize = jnp.dtype(out_dtype).itemsize
    bytes_accessed = (l2.size * l2.dtype.itemsize
                      + y2.size * y2.dtype.itemsize
                      + w2.size * w2.dtype.itemsize
                      + slab_n * out_itemsize)

    out2d = pl.pallas_call(
        _focal_loss_kernel,
        out_shape=jax.ShapeDtypeStruct((rows, LANES), out_dtype),
        grid_spec=pltpu.PrefetchScalarGridSpec(
            num_scalar_prefetch=0,
            grid=(num_blocks,),
            in_specs=[spec, spec, spec],
            out_specs=spec,
        ),
        compiler_params=pltpu.CompilerParams(
            dimension_semantics=("parallel",)),
        cost_estimate=pl.CostEstimate(
            flops=20 * slab_n,
            transcendentals=3 * slab_n,   # softplus = exp + log1p, plus exp(-sp)
            bytes_accessed=bytes_accessed),
    )(l2, y2, w2)

    loss = out2d.reshape(-1)              # free reshape
    if slab_n != n:
        loss = loss[:n]                   # only for ragged N
    # TODO(synk): label_smoothing and reduction='mean'|'sum' paths of the module
    # are not exercised (defaults None / 'none'); a reduction path would use an
    # in-kernel partial-sum accumulator instead of writing the full slab.
    return loss.reshape(orig_shape), GAMMA


def _focal_loss_ref(logits, labels, label_weights):
    # Pure-JAX reference mirroring the PyTorch module (reduction='none').
    x = jnp.clip(logits.astype(jnp.float32), -10.0, 10.0)
    y = labels.astype(jnp.float32)
    pw = label_weights.astype(jnp.float32)
    p = jnp.clip(jax.nn.sigmoid(x), EPS, 1.0 - EPS)
    ce = -(pw * y * (-jax.nn.softplus(-x)) + (1.0 - y) * (-jax.nn.softplus(x)))
    pt = jnp.clip(y * p + (1.0 - y) * (1.0 - p), EPS, 1.0)
    fl = ((1.0 - pt) ** GAMMA) * ce
    alpha_t = ALPHA * y + (1.0 - ALPHA) * (1.0 - y)
    return alpha_t * fl


if __name__ == "__main__":
    key = jax.random.PRNGKey(0)
    k1, k2, k3 = jax.random.split(key, 3)

    # N deliberately NOT a multiple of 1024: exercises the minimal-pad + slice path.
    N = 2000
    logits = jax.random.normal(k1, (N,), dtype=jnp.float32) * 4.0
    # Narrow side-input dtypes (HBM bandwidth): int8 labels are exact, bf16
    # pos_weights are a demo-only precision tradeoff (caller-visible vs f32).
    labels = jax.random.bernoulli(k2, p=0.3, shape=(N,)).astype(jnp.int8)
    label_weights = jax.random.uniform(
        k3, (N,), jnp.float32, minval=0.5, maxval=2.0).astype(jnp.bfloat16)

    loss, gamma = focal_loss(logits, labels, label_weights)
    loss = jax.block_until_ready(loss)

    ref = _focal_loss_ref(logits, labels, label_weights)
    assert loss.shape == (N,)
    assert loss.dtype == jnp.float32
    assert jnp.allclose(loss, ref, atol=1e-5, rtol=1e-5), "mismatch vs reference"
    assert float(gamma) == GAMMA

    # Lane-aligned N (multiple of 1024): zero wrapper-side copies end to end.
    N2 = 3072
    ka, kb, kc = jax.random.split(jax.random.PRNGKey(1), 3)
    lg2 = jax.random.normal(ka, (N2,), dtype=jnp.float32) * 4.0
    lb2 = jax.random.bernoulli(kb, p=0.3, shape=(N2,)).astype(jnp.int8)
    lw2 = jax.random.uniform(kc, (N2,), jnp.float32, 0.5, 2.0).astype(jnp.bfloat16)
    loss2, _ = focal_loss(lg2, lb2, lw2)
    loss2 = jax.block_until_ready(loss2)
    assert jnp.allclose(loss2, _focal_loss_ref(lg2, lb2, lw2), atol=1e-5, rtol=1e-5)

    print("KERNEL_OK")
</pallas_src>

<mosaic_0001>
module attributes {stable_mosaic.version = 11 : i64} {
  func.func @_focal_loss_kernel(%arg0: i32, %arg1: memref<16x128xf32, #tpu.memory_space<vmem>>, %arg2: memref<16x128xi8, #tpu.memory_space<vmem>>, %arg3: memref<16x128xbf16, #tpu.memory_space<vmem>>, %arg4: memref<16x128xf32, #tpu.memory_space<vmem>>) attributes {dimension_semantics = [#tpu.dimension_semantics<parallel>], iteration_bounds = array<i64: 1>, scalar_prefetch = 0 : i64, scratch_operands = 0 : i64, tpu.core_type = #tpu.core_type<tc>, window_params = [{transform_indices = @transform_0, window_bounds = array<i64: 16, 128>}, {transform_indices = @transform_1, window_bounds = array<i64: 16, 128>}, {transform_indices = @transform_2, window_bounds = array<i64: 16, 128>}, {transform_indices = @transform_3, window_bounds = array<i64: 16, 128>}]} {
    %c0 = arith.constant 0 : index
    %c0_0 = arith.constant 0 : index
    %0 = vector.load %arg1[%c0, %c0_0] : memref<16x128xf32, #tpu.memory_space<vmem>>, vector<16x128xf32>
    %cst = arith.constant -1.000000e+01 : f32
    %cst_1 = arith.constant 1.000000e+01 : f32
    %1 = vector.broadcast %cst : f32 to vector<16x128xf32>
    %2 = arith.maximumf %1, %0 : vector<16x128xf32>
    %3 = vector.broadcast %cst_1 : f32 to vector<16x128xf32>
    %4 = arith.minimumf %3, %2 : vector<16x128xf32>
    %c0_2 = arith.constant 0 : index
    %c0_3 = arith.constant 0 : index
    %5 = vector.load %arg2[%c0_2, %c0_3] : memref<16x128xi8, #tpu.memory_space<vmem>>, vector<16x128xi8>
    %6 = arith.sitofp %5 : vector<16x128xi8> to vector<16x128xf32>
    %c0_4 = arith.constant 0 : index
    %c0_5 = arith.constant 0 : index
    %7 = vector.load %arg3[%c0_4, %c0_5] : memref<16x128xbf16, #tpu.memory_space<vmem>>, vector<16x128xbf16>
    %8 = arith.extf %7 : vector<16x128xbf16> to vector<16x128xf32>
    %cst_6 = arith.constant 0.000000e+00 : f32
    %9 = vector.broadcast %cst_6 : f32 to vector<16x128xf32>
    %10 = arith.subf %9, %4 : vector<16x128xf32>
    %cst_7 = arith.constant 0.000000e+00 : f32
    %11 = vector.broadcast %cst_7 : f32 to vector<16x128xf32>
    %12 = arith.maximumf %10, %11 : vector<16x128xf32>
    %13 = vector.broadcast %cst_7 : f32 to vector<16x128xf32>
    %14 = arith.subf %10, %13 : vector<16x128xf32>
    %15 = arith.cmpf one, %14, %14 : vector<16x128xf32>
    %16 = vector.broadcast %cst_7 : f32 to vector<16x128xf32>
    %17 = arith.addf %10, %16 : vector<16x128xf32>
    %18 = math.absf %14 : vector<16x128xf32>
    %cst_8 = arith.constant 0.000000e+00 : f32
    %19 = vector.broadcast %cst_8 : f32 to vector<16x128xf32>
    %20 = arith.subf %19, %18 : vector<16x128xf32>
    %21 = math.exp %20 : vector<16x128xf32>
    %22 = math.log1p %21 : vector<16x128xf32>
    %23 = arith.addf %12, %22 : vector<16x128xf32>
    %24 = arith.select %15, %17, %23 : vector<16x128xi1>, vector<16x128xf32>
    %cst_9 = arith.constant 0.000000e+00 : f32
    %25 = vector.broadcast %cst_9 : f32 to vector<16x128xf32>
    %26 = arith.subf %25, %24 : vector<16x128xf32>
    %27 = math.exp %26 : vector<16x128xf32>
    %cst_10 = arith.constant 0.000000e+00 : f32
    %28 = vector.broadcast %cst_10 : f32 to vector<16x128xf32>
    %29 = arith.cmpf one, %6, %28 : vector<16x128xf32>
    %cst_11 = arith.constant 1.000000e+00 : f32
    %30 = vector.broadcast %cst_11 : f32 to vector<16x128xf32>
    %31 = arith.subf %30, %27 : vector<16x128xf32>
    %32 = arith.select %29, %31, %27 : vector<16x128xi1>, vector<16x128xf32>
    %cst_12 = arith.constant 2.500000e-01 : f32
    %33 = vector.broadcast %cst_12 : f32 to vector<16x128xf32>
    %34 = arith.mulf %33, %8 : vector<16x128xf32>
    %35 = arith.mulf %34, %6 : vector<16x128xf32>
    %cst_13 = arith.constant 1.000000e+00 : f32
    %36 = vector.broadcast %cst_13 : f32 to vector<16x128xf32>
    %37 = arith.subf %36, %6 : vector<16x128xf32>
    %cst_14 = arith.constant 7.500000e-01 : f32
    %38 = vector.broadcast %cst_14 : f32 to vector<16x128xf32>
    %39 = arith.mulf %38, %37 : vector<16x128xf32>
    %40 = arith.mulf %32, %32 : vector<16x128xf32>
    %41 = arith.mulf %35, %24 : vector<16x128xf32>
    %42 = arith.addf %4, %24 : vector<16x128xf32>
    %43 = arith.mulf %39, %42 : vector<16x128xf32>
    %44 = arith.addf %41, %43 : vector<16x128xf32>
    %45 = arith.mulf %40, %44 : vector<16x128xf32>
    %c0_15 = arith.constant 0 : index
    %c0_16 = arith.constant 0 : index
    %46 = vector.load %arg4[%c0_15, %c0_16] : memref<16x128xf32, #tpu.memory_space<vmem>>, vector<16x128xf32>
    tpu.vector_store %arg4[%c0_15, %c0_16], %45 {strides = array<i32>} : memref<16x128xf32, #tpu.memory_space<vmem>>, vector<16x128xf32>,
    return
  }
  func.func @transform_0(%arg0: i32) -> (i32, i32) {
    %c0_i32 = arith.constant 0 : i32
    %c0_i32_0 = arith.constant 0 : i32
    return %arg0, %c0_i32 : i32, i32
  }
  func.func @transform_1(%arg0: i32) -> (i32, i32) {
    %c0_i32 = arith.constant 0 : i32
    %c0_i32_0 = arith.constant 0 : i32
    return %arg0, %c0_i32 : i32, i32
  }
  func.func @transform_2(%arg0: i32) -> (i32, i32) {
    %c0_i32 = arith.constant 0 : i32
    %c0_i32_0 = arith.constant 0 : i32
    return %arg0, %c0_i32 : i32, i32
  }
  func.func @transform_3(%arg0: i32) -> (i32, i32) {
    %c0_i32 = arith.constant 0 : i32
    %c0_i32_0 = arith.constant 0 : i32
    return %arg0, %c0_i32 : i32, i32
  }
}

</mosaic_0001>

<llo_original>
// kernel: focal_loss.1
$region0: #{focal_loss.1}
  #allocation0 [shape = 'u32[]', space=smem, size = 0x4, offset = 0x4, fixed_abs, tag = 'smem constant byte address 0x4 - core index']
  #allocation1 [shape = 'u32[144,128]{1,0:T(1,128)}', space=vmem, size = 0x12000, scoped, tag = 'internal scratch']
  %s0 = inlined_call_operand.vmem [shape: f32[16,128], index: 0, kind: input, shape index: {}]
  %s1 = inlined_call_operand.vmem [shape: s8[16,128], index: 1, kind: input, shape index: {}]
  %s2 = inlined_call_operand.vmem [shape: bf16[16,128], index: 2, kind: input, shape index: {}]
  %s3 = inlined_call_operand.hbm [shape: f32[16,128], index: 3, kind: output, shape index: {}]
  %s4 = sld [smem:[#allocation0]]
  $region22: #{focal_loss.1} parent=0
    _
  %s6 = ssub.s32 1, %s4
  %s7 = scalar_select 0, %s6, %s4
  $region1: #{focal_loss.1} parent=0
    #allocation2 [shape = 'u8[8192]{0}', space=vmem, size = 0x2000, scoped, tag = 'output window, operand 0, single buffered']
    #allocation3 [shape = 's32[1]{0}', space=sflag, size = 0x4, scoped, tag = 'scoped memory for focal_loss.1']
    %8 = vsyncpa [#allocation3], 0
    // Predicated region
    $region2: #{focal_loss.1} parent=1 // pred_check
      _
    $region3: #{focal_loss.1} parent=1 // pred_check_branch
      %10 = sbr.rel (0) target = $region5
    $region4: #{focal_loss.1} parent=1 // pred_region
      _
    $region5: #{focal_loss.1} parent=1 // pred_fallthru
      _
    // Predicated region
    $region6: #{focal_loss.1} parent=1 // pred_check
      _
    $region7: #{focal_loss.1} parent=1 // pred_check_branch
      %12 = sbr.rel (0) target = $region9
    $region8: #{focal_loss.1} parent=1 // pred_region
      _
    $region9: #{focal_loss.1} parent=1 // pred_fallthru
      _
    // Predicated region
    $region10: #{focal_loss.1} parent=1 // pred_check
      _
    $region11: #{focal_loss.1} parent=1 // pred_check_branch
      %14 = sbr.rel (0) target = $region13
    $region12: #{focal_loss.1} parent=1 // pred_region
      _
    $region13: #{focal_loss.1} parent=1 // pred_fallthru
      _
    %v15 = vld [vmem:[%s0] sm:$0xff]
    %v16 = vld [vmem:[%s0 + $0x8] sm:$0xff]
    %v17 = vmax.f32 %v15, -10.0
    %v18 = vmax.f32 %v16, -10.0
    %v19 = vmin.f32 %v17, 10.0
    %v20 = vmin.f32 %v18, 10.0
    %v21 = vld [vmem:[%s1] sm:$0x3]
    %v22 = vld [vmem:[%s1 + $0x2] sm:$0x3]
    %v23 = vunpack.c.0.s8 %v21
    %v24 = vunpack.c.0.s8 %v22
    %v25 = vcvt.s32.f32 %v23
    %v26 = vcvt.s32.f32 %v24
    %v27 = vld [vmem:[%s2] sm:$0xf]
    %v28 = vld [vmem:[%s2 + $0x4] sm:$0xf]
    %v29 = vunpack.c.l.bf16 %v27
    %v30 = vunpack.c.l.bf16 %v28
    %v31 = vsub.f32 0.0, %v19
    %v32 = vsub.f32 0.0, %v20
    %v33 = vmax.f32 %v31, 0.0
    %v34 = vmax.f32 %v32, 0.0
    %vm35 = vcmp.ne.f32.partialorder %v31, %v31
    %vm36 = vcmp.ne.f32.partialorder %v32, %v32
    %v37 = vadd.f32 %v31, 0.0
    %v38 = vadd.f32 %v32, 0.0
    %v39 = vand.u32 2147483647, %v31
    %v40 = vand.u32 2147483647, %v32
    %v41 = vsub.f32 0.0, %v39
    %v42 = vsub.f32 0.0, %v40
    %v43 = vmul.f32 %v41, 1.442695
    %v44 = vpow.pop %v43
    %v45 = vmul.f32 %v42, 1.442695
    %v46 = vpow.pop %v45
    %v47 = vadd.f32 %v44, 1.0
    %v48 = vlog2.pop %v47
    %v49 = vmul.f32 %v48, 0.6931472
    %v50 = vmul.f32 -0.5, %v44
    %v51 = vadd.f32 %v50, 1.0
    %v52 = vmul.f32 %v51, %v44
    %v53 = vand.u32 2147483647, %v44
    %vm54 = vcmp.lt.f32.partialorder %v53, 0.0004427343
    %v55 = vsel %vm54, %v52, %v49
    %v56 = vadd.f32 %v46, 1.0
    %v57 = vlog2.pop %v56
    %v58 = vmul.f32 %v57, 0.6931472
    %v59 = vmul.f32 -0.5, %v46
    %v60 = vadd.f32 %v59, 1.0
    %v61 = vmul.f32 %v60, %v46
    %v62 = vand.u32 2147483647, %v46
    %vm63 = vcmp.lt.f32.partialorder %v62, 0.0004427343
    %v64 = vsel %vm63, %v61, %v58
    %v65 = vadd.f32 %v33, %v55
    %v66 = vadd.f32 %v34, %v64
    %v67 = vsel %vm35, %v37, %v65
    %v68 = vsel %vm36, %v38, %v66
    %v69 = vsub.f32 0.0, %v67
    %v70 = vsub.f32 0.0, %v68
    %v71 = vmul.f32 %v69, 1.442695
    %v72 = vpow.pop %v71
    %v73 = vmul.f32 %v70, 1.442695
    %v74 = vpow.pop %v73
    %vm75 = vcmp.ne.f32.partialorder %v25, 0.0
    %vm76 = vcmp.ne.f32.partialorder %v26, 0.0
    %v77 = vsub.f32 1.0, %v72
    %v78 = vsub.f32 1.0, %v74
    %v79 = vsel %vm75, %v77, %v72
    %v80 = vsel %vm76, %v78, %v74
    %v81 = vmul.f32 %v29, 0.25
    %v82 = vmul.f32 %v30, 0.25
    %v83 = vmul.f32 %v81, %v25
    %v84 = vmul.f32 %v82, %v26
    %v85 = vsub.f32 1.0, %v25
    %v86 = vsub.f32 1.0, %v26
    %v87 = vmul.f32 %v85, 0.75
    %v88 = vmul.f32 %v86, 0.75
    %v89 = vmul.f32 %v79, %v79
    %v90 = vmul.f32 %v80, %v80
    %v91 = vmul.f32 %v83, %v67
    %v92 = vmul.f32 %v84, %v68
    %v93 = vadd.f32 %v19, %v67
    %v94 = vadd.f32 %v20, %v68
    %v95 = vmul.f32 %v87, %v93
    %v96 = vmul.f32 %v88, %v94
    %v97 = vadd.f32 %v91, %v95
    %v98 = vadd.f32 %v92, %v96
    %v99 = vmul.f32 %v89, %v97
    %v100 = vmul.f32 %v90, %v98
    %101 = vst [vmem:[#allocation2] sm:$0xff] %v99
    %102 = vst [vmem:[#allocation2 + $0x8] sm:$0xff] %v100
    // Predicated region
    $region14: #{focal_loss.1} parent=1 // pred_check
      _
    $region15: #{focal_loss.1} parent=1 // pred_check_branch
      %104 = sbr.rel (0) target = $region17
    $region16: #{focal_loss.1} parent=1 // pred_region
      %s106 = ssub.s32 256, 256
      %107 = vsyncadd [#allocation3], %s106
      %s108 = sshll.u32 [#allocation2], 4
      %s109 = int_to_ptr.vmem [resolvable:$true] %s108
      %114 = dma.vmem_to_hbm [thread:$0]  %s109, 256, %s3, [#allocation3], 128, 128, 8
    $region17: #{focal_loss.1} parent=1 // pred_fallthru
      _
    // Predicated region
    $region18: #{focal_loss.1} parent=1 // pred_check
      _
    $region19: #{focal_loss.1} parent=1 // pred_check_branch
      %116 = sbr.rel (0) target = $region21
    $region20: #{focal_loss.1} parent=1 // pred_region
      %117 = dma.done [#allocation3], 256
    $region21: #{focal_loss.1} parent=1 // pred_fallthru
      _
    %118 = vsyncpa [#allocation3], 1

</llo_original>
